<compile_context>
chip_gen: v5e
topology: v5e:2x2
jax: 0.10.0
libtpu: 0.0.40
codegen_flags: <defaults>
</compile_context>

<pallas_src>
import functools

import jax
import jax.numpy as jnp
from jax.experimental import pallas as pl
from jax.experimental.pallas import tpu as pltpu

NUM_FEATURES = 3                                  # small synthetic graph feature count
OUT_CHANNELS = 4                                  # as in the reference script
LATENT_DIM = OUT_CHANNELS * NUM_FEATURES          # 12
H1 = 8                                            # mlp1 hidden width
H2 = 24                                           # mlp_lin hidden width
HF = H1 + H2                                      # fused hidden width = 32
O1 = 9                                            # mlp1 output width
O2 = LATENT_DIM ** 2 + 2 * LATENT_DIM             # 168
BN_EPS = 1e-5

TILE_B_MAX = 2048                                 # batch rows per grid step
VMEM_LIMIT = 32 * 1024 * 1024                     # explicit scoped-VMEM budget


def _round_up(x, m):
    return (x + m - 1) // m * m


# --------------------------------------------------------------------------
# Fast path: whole batch in one tile -> fully fused single kernel.
#   h     = z @ [w1a | w2a] + [b1a | b2a]
#   stats = full-batch mean/var of h (pad rows masked)
#   h     = relu(h * scale + shift)   (BN fold; identity scale/shift on mlp1 half)
#   x     = h @ w1b_pad + b1b
#   lin   = h @ w2b_pad + b2b
# --------------------------------------------------------------------------
def _fused_single_tile_kernel(z_ref, wa_ref, ba_ref, gamma_ref, beta_ref,
                              w1b_ref, b1b_ref, w2b_ref, b2b_ref,
                              x_ref, lin_ref, *, true_b):
    tile_b = z_ref.shape[0]
    h = jnp.dot(z_ref[...], wa_ref[...],
                preferred_element_type=jnp.float32) + ba_ref[...]

    # Train-mode BatchNorm statistics over the full (valid) batch.
    if tile_b != true_b:
        row = jax.lax.broadcasted_iota(jnp.int32, (tile_b, 1), 0)
        hv = jnp.where(row < true_b, h, 0.0)
    else:
        hv = h
    inv_n = jnp.float32(1.0 / true_b)
    mean = jnp.sum(hv, axis=0, keepdims=True) * inv_n                     # (1, HF)
    var = jnp.maximum(jnp.sum(hv * h, axis=0, keepdims=True) * inv_n
                      - mean * mean, 0.0)                                 # biased var

    # Fold BN into scale/shift; identity on the mlp1 half (cols < H1).
    col = jax.lax.broadcasted_iota(jnp.int32, (1, HF), 1)
    scale_bn = gamma_ref[...] * jax.lax.rsqrt(var + BN_EPS)
    shift_bn = beta_ref[...] - mean * scale_bn
    scale = jnp.where(col >= H1, scale_bn, 1.0)
    shift = jnp.where(col >= H1, shift_bn, 0.0)

    h = jnp.maximum(h * scale + shift, 0.0)
    hc = h.astype(w1b_ref.dtype)      # no-op in f32; narrows for bf16 weights
    x_ref[...] = (jnp.dot(hc, w1b_ref[...], preferred_element_type=jnp.float32)
                  + b1b_ref[...]).astype(x_ref.dtype)
    lin_ref[...] = (jnp.dot(hc, w2b_ref[...], preferred_element_type=jnp.float32)
                    + b2b_ref[...]).astype(lin_ref.dtype)


# --------------------------------------------------------------------------
# Multi-tile pass 1: full-batch BatchNorm statistics of the fused hidden layer.
# Resident (2, HF) accumulator: row 0 = sum(h), row 1 = sum(h^2) over valid rows.
# --------------------------------------------------------------------------
def _bn_stats_kernel(z_ref, wa_ref, ba_ref, stats_ref, *, tile_b, true_b, need_mask):
    i = pl.program_id(0)

    @pl.when(i == 0)
    def _():
        stats_ref[...] = jnp.zeros_like(stats_ref)

    h = jnp.dot(z_ref[...], wa_ref[...],
                preferred_element_type=jnp.float32) + ba_ref[...]
    if need_mask:
        # Mask rows that are batch padding (z was zero-padded in the wrapper).
        row = jax.lax.broadcasted_iota(jnp.int32, (tile_b, 1), 0) + i * tile_b
        hv = jnp.where(row < true_b, h, 0.0)
    else:
        hv = h
    s1 = jnp.sum(hv, axis=0, keepdims=True)          # (1, HF)
    s2 = jnp.sum(hv * h, axis=0, keepdims=True)      # mask * h^2
    stats_ref[...] += jnp.concatenate([s1, s2], axis=0)


# --------------------------------------------------------------------------
# Multi-tile pass 2: fused forward with precomputed BN scale/shift.
# --------------------------------------------------------------------------
def _decoder_kernel(z_ref, wa_ref, ba_ref, scale_ref, shift_ref,
                    w1b_ref, b1b_ref, w2b_ref, b2b_ref,
                    x_ref, lin_ref):
    h = jnp.dot(z_ref[...], wa_ref[...],
                preferred_element_type=jnp.float32) + ba_ref[...]
    h = jnp.maximum(h * scale_ref[...] + shift_ref[...], 0.0)
    hc = h.astype(w1b_ref.dtype)
    x_ref[...] = (jnp.dot(hc, w1b_ref[...], preferred_element_type=jnp.float32)
                  + b1b_ref[...]).astype(x_ref.dtype)
    lin_ref[...] = (jnp.dot(hc, w2b_ref[...], preferred_element_type=jnp.float32)
                    + b2b_ref[...]).astype(lin_ref.dtype)


# --------------------------------------------------------------------------
# Wrapper
# --------------------------------------------------------------------------
def decoder_mlp(z, params, *, tile_b_max=TILE_B_MAX, compute_dtype=jnp.float32):
    B = z.shape[0]
    assert z.shape[1] == LATENT_DIM

    f32 = jnp.float32
    # ---- fuse / fold parameters (tiny ops, done under jit) ----
    w_a = jnp.concatenate([params["w1a"], params["w2a"]], axis=1)               # (D, 32)
    b_a = jnp.concatenate([params["b1a"], params["b2a"]], axis=1).astype(f32)   # (1, 32)
    w1b_pad = jnp.concatenate(
        [params["w1b"], jnp.zeros((H2, O1), params["w1b"].dtype)], axis=0)      # (32, 9)
    w2b_pad = jnp.concatenate(
        [jnp.zeros((H1, O2), params["w2b"].dtype), params["w2b"]], axis=0)      # (32, 168)
    b1b = params["b1b"].astype(f32)
    b2b = params["b2b"].astype(f32)

    w_a_c = w_a.astype(compute_dtype)
    w1b_c = w1b_pad.astype(compute_dtype)
    w2b_c = w2b_pad.astype(compute_dtype)

    # ---- batch tiling (pad batch to a multiple of the tile) ----
    tile_b = min(_round_up(max(B, 8), 8), tile_b_max)
    b_pad = _round_up(B, tile_b)
    nb = b_pad // tile_b
    z_c = z.astype(compute_dtype)
    if b_pad != B:
        z_c = jnp.pad(z_c, ((0, b_pad - B), (0, 0)))

    # ========== fast path: single fused kernel (stats + forward) ==========
    if nb == 1:
        gamma_pad = jnp.concatenate(
            [jnp.ones((1, H1), f32), params["gamma"].astype(f32)], axis=1)      # (1, 32)
        beta_pad = jnp.concatenate(
            [jnp.zeros((1, H1), f32), params["beta"].astype(f32)], axis=1)      # (1, 32)
        x_pad, lin_pad = pl.pallas_call(
            functools.partial(_fused_single_tile_kernel, true_b=B),
            out_shape=(jax.ShapeDtypeStruct((b_pad, O1), jnp.float32),
                       jax.ShapeDtypeStruct((b_pad, O2), jnp.float32)),
            compiler_params=pltpu.CompilerParams(vmem_limit_bytes=VMEM_LIMIT),
        )(z_c, w_a_c, b_a, gamma_pad, beta_pad, w1b_c, b1b, w2b_c, b2b)
        return x_pad[:B], lin_pad[:B]

    # ========== multi-tile path: two-pass (full-batch BN statistics) ==========
    z_spec = pl.BlockSpec((tile_b, LATENT_DIM), lambda i: (i, 0))
    const = lambda shape: pl.BlockSpec(shape, lambda i: (0, 0))   # VMEM-resident operand

    # ---- pass 1: batch statistics for train-mode BatchNorm ----
    stats = pl.pallas_call(
        functools.partial(_bn_stats_kernel, tile_b=tile_b, true_b=B,
                          need_mask=(b_pad != B)),
        out_shape=jax.ShapeDtypeStruct((2, HF), jnp.float32),
        grid=(nb,),
        in_specs=[z_spec, const((LATENT_DIM, HF)), const((1, HF))],
        out_specs=const((2, HF)),
        compiler_params=pltpu.CompilerParams(
            dimension_semantics=("arbitrary",),      # resident accumulator -> reduction axis
            vmem_limit_bytes=VMEM_LIMIT),
    )(z_c, w_a_c, b_a)

    mean = stats[0, H1:] / B
    var = jnp.maximum(stats[1, H1:] / B - mean * mean, 0.0)      # biased var (BN fwd)
    bn_scale = params["gamma"][0].astype(f32) * jax.lax.rsqrt(var + BN_EPS)
    bn_shift = params["beta"][0].astype(f32) - mean * bn_scale
    scale = jnp.concatenate([jnp.ones((H1,), f32), bn_scale]).reshape(1, HF)
    shift = jnp.concatenate([jnp.zeros((H1,), f32), bn_shift]).reshape(1, HF)

    # ---- pass 2: fused forward over a parallel batch grid ----
    x_pad, lin_pad = pl.pallas_call(
        _decoder_kernel,
        out_shape=(jax.ShapeDtypeStruct((b_pad, O1), jnp.float32),
                   jax.ShapeDtypeStruct((b_pad, O2), jnp.float32)),
        grid=(nb,),
        in_specs=[z_spec,
                  const((LATENT_DIM, HF)), const((1, HF)),
                  const((1, HF)), const((1, HF)),
                  const((HF, O1)), const((1, O1)),
                  const((HF, O2)), const((1, O2))],
        out_specs=(pl.BlockSpec((tile_b, O1), lambda i: (i, 0)),
                   pl.BlockSpec((tile_b, O2), lambda i: (i, 0))),
        compiler_params=pltpu.CompilerParams(
            dimension_semantics=("parallel",),       # v7x: shard batch across 2 TCs
            vmem_limit_bytes=VMEM_LIMIT),
    )(z_c, w_a_c, b_a, scale, shift, w1b_c, b1b, w2b_c, b2b)

    return x_pad[:B], lin_pad[:B]


# --------------------------------------------------------------------------
# Parameters and pure-JAX reference
# --------------------------------------------------------------------------
def init_params(key):
    """Deterministic synthetic parameters with the module's shapes ([in, out])."""
    ks = jax.random.split(key, 8)

    def lin(kw, fan_in, fan_out):
        bound = 1.0 / jnp.sqrt(jnp.float32(fan_in))
        return jax.random.uniform(kw, (fan_in, fan_out), jnp.float32, -bound, bound)

    return dict(
        w1a=lin(ks[0], LATENT_DIM, H1),
        b1a=jax.random.uniform(ks[1], (1, H1), jnp.float32, -0.1, 0.1),
        w1b=lin(ks[2], H1, O1),
        b1b=jax.random.uniform(ks[3], (1, O1), jnp.float32, -0.1, 0.1),
        w2a=lin(ks[4], LATENT_DIM, H2),
        b2a=jax.random.uniform(ks[5], (1, H2), jnp.float32, -0.1, 0.1),
        gamma=jnp.ones((1, H2), jnp.float32),       # BatchNorm weight init
        beta=jnp.zeros((1, H2), jnp.float32),       # BatchNorm bias init
        w2b=lin(ks[6], H2, O2),
        b2b=jax.random.uniform(ks[7], (1, O2), jnp.float32, -0.1, 0.1),
    )


def decoder_mlp_ref(z, p):
    h1 = jnp.maximum(z @ p["w1a"] + p["b1a"], 0.0)
    x = h1 @ p["w1b"] + p["b1b"]
    h2 = z @ p["w2a"] + p["b2a"]
    mean = jnp.mean(h2, axis=0, keepdims=True)
    var = jnp.mean((h2 - mean) ** 2, axis=0, keepdims=True)     # biased var
    h2 = (h2 - mean) / jnp.sqrt(var + BN_EPS) * p["gamma"] + p["beta"]
    h2 = jnp.maximum(h2, 0.0)
    lin = h2 @ p["w2b"] + p["b2b"]
    return x, lin


if __name__ == "__main__":
    key = jax.random.PRNGKey(0)
    k_z, k_p = jax.random.split(key)

    B = 64                                            # small batch of graph embeddings
    z = jax.random.normal(k_z, (B, LATENT_DIM), jnp.float32)
    params = init_params(k_p)

    x_ref, lin_ref = decoder_mlp_ref(z, params)

    # Default path: whole batch fits in one tile -> single fused kernel.
    x, lin = jax.jit(decoder_mlp)(z, params)
    jax.block_until_ready((x, lin))
    assert x.shape == (B, O1) and lin.shape == (B, O2)
    assert jnp.allclose(x, x_ref, atol=1e-5, rtol=1e-5)
    assert jnp.allclose(lin, lin_ref, atol=1e-5, rtol=1e-5)

    # Multi-tile path: forces a 4-step batch grid, exercising the pipelined
    # main kernel and the two-pass (cross-tile) BatchNorm statistics.
    x2, lin2 = jax.jit(functools.partial(decoder_mlp, tile_b_max=16))(z, params)
    jax.block_until_ready((x2, lin2))
    assert jnp.allclose(x2, x_ref, atol=1e-5, rtol=1e-5)
    assert jnp.allclose(lin2, lin_ref, atol=1e-5, rtol=1e-5)

    # Non-multiple-of-8 batch: exercises the pad-row masking in the BN stats.
    B3 = 13
    z3 = jax.random.normal(jax.random.PRNGKey(3), (B3, LATENT_DIM), jnp.float32)
    x3_ref, lin3_ref = decoder_mlp_ref(z3, params)
    x3, lin3 = jax.jit(decoder_mlp)(z3, params)
    jax.block_until_ready((x3, lin3))
    assert jnp.allclose(x3, x3_ref, atol=1e-5, rtol=1e-5)
    assert jnp.allclose(lin3, lin3_ref, atol=1e-5, rtol=1e-5)

    print("KERNEL_OK")
</pallas_src>

<mosaic_0001>
module attributes {stable_mosaic.version = 11 : i64} {
  func.func @_fused_single_tile_kernel(%arg0: memref<64x12xf32, #tpu.memory_space<vmem>>, %arg1: memref<12x32xf32, #tpu.memory_space<vmem>>, %arg2: memref<1x32xf32, #tpu.memory_space<vmem>>, %arg3: memref<1x32xf32, #tpu.memory_space<vmem>>, %arg4: memref<1x32xf32, #tpu.memory_space<vmem>>, %arg5: memref<32x9xf32, #tpu.memory_space<vmem>>, %arg6: memref<1x9xf32, #tpu.memory_space<vmem>>, %arg7: memref<32x168xf32, #tpu.memory_space<vmem>>, %arg8: memref<1x168xf32, #tpu.memory_space<vmem>>, %arg9: memref<64x9xf32, #tpu.memory_space<vmem>>, %arg10: memref<64x168xf32, #tpu.memory_space<vmem>>) attributes {dimension_semantics = [], scalar_prefetch = 0 : i64, scratch_operands = 0 : i64, tpu.core_type = #tpu.core_type<tc>} {
    %c0 = arith.constant 0 : index
    %c0_0 = arith.constant 0 : index
    %0 = vector.load %arg0[%c0, %c0_0] : memref<64x12xf32, #tpu.memory_space<vmem>>, vector<64x12xf32>
    %c0_1 = arith.constant 0 : index
    %c0_2 = arith.constant 0 : index
    %1 = vector.load %arg1[%c0_1, %c0_2] : memref<12x32xf32, #tpu.memory_space<vmem>>, vector<12x32xf32>
    %cst = arith.constant dense<0.000000e+00> : vector<64x32xf32>
    %2 = tpu.matmul %0, %1, %cst {dimension_numbers = #tpu.dot_dimension_numbers<[1], [0], [0], [1], [0, 0, 1, 1], [], []>} : vector<64x12xf32>, vector<12x32xf32>, vector<64x32xf32> -> vector<64x32xf32>
    %c0_3 = arith.constant 0 : index
    %c0_4 = arith.constant 0 : index
    %3 = vector.load %arg2[%c0_3, %c0_4] : memref<1x32xf32, #tpu.memory_space<vmem>>, vector<1x32xf32>
    %4 = vector.broadcast %3 : vector<1x32xf32> to vector<64x32xf32>
    %5 = arith.addf %2, %4 : vector<64x32xf32>
    %cst_5 = arith.constant dense<0.000000e+00> : vector<32xf32>
    %6 = vector.multi_reduction <add>, %5, %cst_5 [0] : vector<64x32xf32> to vector<32xf32>
    %7 = vector.shape_cast %6 : vector<32xf32> to vector<1x32xf32>
    %cst_6 = arith.constant 1.562500e-02 : f32
    %8 = vector.broadcast %cst_6 : f32 to vector<1x32xf32>
    %9 = arith.mulf %7, %8 : vector<1x32xf32>
    %10 = arith.mulf %5, %5 : vector<64x32xf32>
    %cst_7 = arith.constant dense<0.000000e+00> : vector<32xf32>
    %11 = vector.multi_reduction <add>, %10, %cst_7 [0] : vector<64x32xf32> to vector<32xf32>
    %12 = vector.shape_cast %11 : vector<32xf32> to vector<1x32xf32>
    %cst_8 = arith.constant 1.562500e-02 : f32
    %13 = vector.broadcast %cst_8 : f32 to vector<1x32xf32>
    %14 = arith.mulf %12, %13 : vector<1x32xf32>
    %15 = arith.mulf %9, %9 : vector<1x32xf32>
    %16 = arith.subf %14, %15 : vector<1x32xf32>
    %cst_9 = arith.constant 0.000000e+00 : f32
    %17 = vector.broadcast %cst_9 : f32 to vector<1x32xf32>
    %18 = arith.maximumf %16, %17 : vector<1x32xf32>
    %19 = tpu.iota {dimensions = array<i32: 1>} : vector<1x32xi32>
    %c0_10 = arith.constant 0 : index
    %c0_11 = arith.constant 0 : index
    %20 = vector.load %arg3[%c0_10, %c0_11] : memref<1x32xf32, #tpu.memory_space<vmem>>, vector<1x32xf32>
    %cst_12 = arith.constant 9.99999974E-6 : f32
    %21 = vector.broadcast %cst_12 : f32 to vector<1x32xf32>
    %22 = arith.addf %18, %21 : vector<1x32xf32>
    %23 = math.rsqrt %22 : vector<1x32xf32>
    %24 = arith.mulf %20, %23 : vector<1x32xf32>
    %c0_13 = arith.constant 0 : index
    %c0_14 = arith.constant 0 : index
    %25 = vector.load %arg4[%c0_13, %c0_14] : memref<1x32xf32, #tpu.memory_space<vmem>>, vector<1x32xf32>
    %26 = arith.mulf %9, %24 : vector<1x32xf32>
    %27 = arith.subf %25, %26 : vector<1x32xf32>
    %c8_i32 = arith.constant 8 : i32
    %28 = vector.broadcast %c8_i32 : i32 to vector<1x32xi32>
    %29 = arith.cmpi sge, %19, %28 : vector<1x32xi32>
    %cst_15 = arith.constant 1.000000e+00 : f32
    %30 = vector.broadcast %cst_15 : f32 to vector<1x32xf32>
    %31 = arith.select %29, %24, %30 : vector<1x32xi1>, vector<1x32xf32>
    %c8_i32_16 = arith.constant 8 : i32
    %32 = vector.broadcast %c8_i32_16 : i32 to vector<1x32xi32>
    %33 = arith.cmpi sge, %19, %32 : vector<1x32xi32>
    %cst_17 = arith.constant 0.000000e+00 : f32
    %34 = vector.broadcast %cst_17 : f32 to vector<1x32xf32>
    %35 = arith.select %33, %27, %34 : vector<1x32xi1>, vector<1x32xf32>
    %36 = vector.broadcast %31 : vector<1x32xf32> to vector<64x32xf32>
    %37 = arith.mulf %5, %36 : vector<64x32xf32>
    %38 = vector.broadcast %35 : vector<1x32xf32> to vector<64x32xf32>
    %39 = arith.addf %37, %38 : vector<64x32xf32>
    %cst_18 = arith.constant 0.000000e+00 : f32
    %40 = vector.broadcast %cst_18 : f32 to vector<64x32xf32>
    %41 = arith.maximumf %39, %40 : vector<64x32xf32>
    %c0_19 = arith.constant 0 : index
    %c0_20 = arith.constant 0 : index
    %42 = vector.load %arg5[%c0_19, %c0_20] : memref<32x9xf32, #tpu.memory_space<vmem>>, vector<32x9xf32>
    %cst_21 = arith.constant dense<0.000000e+00> : vector<64x9xf32>
    %43 = tpu.matmul %41, %42, %cst_21 {dimension_numbers = #tpu.dot_dimension_numbers<[1], [0], [0], [1], [0, 0, 1, 1], [], []>} : vector<64x32xf32>, vector<32x9xf32>, vector<64x9xf32> -> vector<64x9xf32>
    %c0_22 = arith.constant 0 : index
    %c0_23 = arith.constant 0 : index
    %44 = vector.load %arg6[%c0_22, %c0_23] : memref<1x9xf32, #tpu.memory_space<vmem>>, vector<1x9xf32>
    %45 = vector.broadcast %44 : vector<1x9xf32> to vector<64x9xf32>
    %46 = arith.addf %43, %45 : vector<64x9xf32>
    %c0_24 = arith.constant 0 : index
    %c0_25 = arith.constant 0 : index
    %47 = vector.load %arg9[%c0_24, %c0_25] : memref<64x9xf32, #tpu.memory_space<vmem>>, vector<64x9xf32>
    tpu.vector_store %arg9[%c0_24, %c0_25], %46 {strides = array<i32>} : memref<64x9xf32, #tpu.memory_space<vmem>>, vector<64x9xf32>,
    %c0_26 = arith.constant 0 : index
    %c0_27 = arith.constant 0 : index
    %48 = vector.load %arg7[%c0_26, %c0_27] : memref<32x168xf32, #tpu.memory_space<vmem>>, vector<32x168xf32>
    %cst_28 = arith.constant dense<0.000000e+00> : vector<64x168xf32>
    %49 = tpu.matmul %41, %48, %cst_28 {dimension_numbers = #tpu.dot_dimension_numbers<[1], [0], [0], [1], [0, 0, 1, 1], [], []>} : vector<64x32xf32>, vector<32x168xf32>, vector<64x168xf32> -> vector<64x168xf32>
    %c0_29 = arith.constant 0 : index
    %c0_30 = arith.constant 0 : index
    %50 = vector.load %arg8[%c0_29, %c0_30] : memref<1x168xf32, #tpu.memory_space<vmem>>, vector<1x168xf32>
    %51 = vector.broadcast %50 : vector<1x168xf32> to vector<64x168xf32>
    %52 = arith.addf %49, %51 : vector<64x168xf32>
    %c0_31 = arith.constant 0 : index
    %c0_32 = arith.constant 0 : index
    %53 = vector.load %arg10[%c0_31, %c0_32] : memref<64x168xf32, #tpu.memory_space<vmem>>, vector<64x168xf32>
    tpu.vector_store %arg10[%c0_31, %c0_32], %52 {strides = array<i32>} : memref<64x168xf32, #tpu.memory_space<vmem>>, vector<64x168xf32>,
    return
  }
}

</mosaic_0001>

<llo_original>
// kernel: decoder_mlp.1
$region0: #{decoder_mlp.1}
  #allocation0 [shape = 'u32[]', space=smem, size = 0x4, offset = 0x4, fixed_abs, tag = 'smem constant byte address 0x4 - core index']
  #allocation1 [shape = 'u32[72,128]{1,0:T(1,128)}', space=vmem, size = 0x9000, scoped, tag = 'internal scratch']
  %s0 = inlined_call_operand.vmem [shape: f32[64,12], index: 0, kind: input, shape index: {}]
  %s1 = inlined_call_operand.vmem [shape: f32[12,32], index: 1, kind: input, shape index: {}]
  %s2 = inlined_call_operand.vmem [shape: f32[1,32], index: 2, kind: input, shape index: {}]
  %s3 = inlined_call_operand.vmem [shape: f32[1,32], index: 3, kind: input, shape index: {}]
  %s4 = inlined_call_operand.vmem [shape: f32[1,32], index: 4, kind: input, shape index: {}]
  %s5 = inlined_call_operand.vmem [shape: f32[32,9], index: 5, kind: input, shape index: {}]
  %s6 = inlined_call_operand.vmem [shape: f32[1,9], index: 6, kind: input, shape index: {}]
  %s7 = inlined_call_operand.vmem [shape: f32[32,168], index: 7, kind: input, shape index: {}]
  %s8 = inlined_call_operand.vmem [shape: f32[1,168], index: 8, kind: input, shape index: {}]
  %s9 = inlined_call_operand.vmem [shape: f32[64,9], index: 9, kind: output, shape index: {0}]
  %s10 = inlined_call_operand.hbm [shape: f32[64,168], index: 10, kind: output, shape index: {1}]
  %11 = xla_tuple %s9, %s10
  %s12 = sld [smem:[#allocation0]]
  $region54: #{decoder_mlp.1} parent=0
    _
  %s14 = ssub.s32 1, %s12
  %s15 = scalar_select 0, %s14, %s12
  $region1: #{decoder_mlp.1} parent=0
    #allocation2 [shape = 'u8[65536]{0}', space=vmem, size = 0x10000, scoped, tag = 'output window, operand 1, single buffered']
    #allocation3 [shape = 's32[1]{0}', space=sflag, size = 0x4, scoped, tag = 'scoped memory for decoder_mlp.1']
    %16 = vsyncpa [#allocation3], 0
    // Predicated region
    $region2: #{decoder_mlp.1} parent=1 // pred_check
      _
    $region3: #{decoder_mlp.1} parent=1 // pred_check_branch
      %18 = sbr.rel (0) target = $region5
    $region4: #{decoder_mlp.1} parent=1 // pred_region
      _
    $region5: #{decoder_mlp.1} parent=1 // pred_fallthru
      _
    // Predicated region
    $region6: #{decoder_mlp.1} parent=1 // pred_check
      _
    $region7: #{decoder_mlp.1} parent=1 // pred_check_branch
      %20 = sbr.rel (0) target = $region9
    $region8: #{decoder_mlp.1} parent=1 // pred_region
      _
    $region9: #{decoder_mlp.1} parent=1 // pred_fallthru
      _
    // Predicated region
    $region10: #{decoder_mlp.1} parent=1 // pred_check
      _
    $region11: #{decoder_mlp.1} parent=1 // pred_check_branch
      %22 = sbr.rel (0) target = $region13
    $region12: #{decoder_mlp.1} parent=1 // pred_region
      _
    $region13: #{decoder_mlp.1} parent=1 // pred_fallthru
      _
    // Predicated region
    $region14: #{decoder_mlp.1} parent=1 // pred_check
      _
    $region15: #{decoder_mlp.1} parent=1 // pred_check_branch
      %24 = sbr.rel (0) target = $region17
    $region16: #{decoder_mlp.1} parent=1 // pred_region
      _
    $region17: #{decoder_mlp.1} parent=1 // pred_fallthru
      _
    // Predicated region
    $region18: #{decoder_mlp.1} parent=1 // pred_check
      _
    $region19: #{decoder_mlp.1} parent=1 // pred_check_branch
      %26 = sbr.rel (0) target = $region21
    $region20: #{decoder_mlp.1} parent=1 // pred_region
      _
    $region21: #{decoder_mlp.1} parent=1 // pred_fallthru
      _
    // Predicated region
    $region22: #{decoder_mlp.1} parent=1 // pred_check
      _
    $region23: #{decoder_mlp.1} parent=1 // pred_check_branch
      %28 = sbr.rel (0) target = $region25
    $region24: #{decoder_mlp.1} parent=1 // pred_region
      _
    $region25: #{decoder_mlp.1} parent=1 // pred_fallthru
      _
    // Predicated region
    $region26: #{decoder_mlp.1} parent=1 // pred_check
      _
    $region27: #{decoder_mlp.1} parent=1 // pred_check_branch
      %30 = sbr.rel (0) target = $region29
    $region28: #{decoder_mlp.1} parent=1 // pred_region
      _
    $region29: #{decoder_mlp.1} parent=1 // pred_fallthru
      _
    // Predicated region
    $region30: #{decoder_mlp.1} parent=1 // pred_check
      _
    $region31: #{decoder_mlp.1} parent=1 // pred_check_branch
      %32 = sbr.rel (0) target = $region33
    $region32: #{decoder_mlp.1} parent=1 // pred_region
      _
    $region33: #{decoder_mlp.1} parent=1 // pred_fallthru
      _
    // Predicated region
    $region34: #{decoder_mlp.1} parent=1 // pred_check
      _
    $region35: #{decoder_mlp.1} parent=1 // pred_check_branch
      %34 = sbr.rel (0) target = $region37
    $region36: #{decoder_mlp.1} parent=1 // pred_region
      _
    $region37: #{decoder_mlp.1} parent=1 // pred_fallthru
      _
    %v35 = vld [vmem:[%s0] sm:$0xff]
    %v36 = vld [vmem:[%s0 + $0x8] sm:$0xff]
    %v37 = vld [vmem:[%s0 + $0x10] sm:$0xff]
    %v38 = vld [vmem:[%s0 + $0x18] sm:$0xff]
    %v39 = vld [vmem:[%s0 + $0x20] sm:$0xff]
    %v40 = vld [vmem:[%s0 + $0x28] sm:$0xff]
    %v41 = vld [vmem:[%s0 + $0x30] sm:$0xff]
    %v42 = vld [vmem:[%s0 + $0x38] sm:$0xff]
    %v43 = vld [vmem:[%s1] sm:$0xff]
    %v44 = vld [vmem:[%s1 + $0x8] sm:$0xf]
    %v45 = vld [vmem:[%s2] sm:$0x1]
    %v47 = vperm.slane %v45, 0
    %vm49 = vcmask 97280
    %v51 = vsel %vm49, %v35, 0
    %v54 = vsel %vm49, %v36, 0
    %v57 = vsel %vm49, %v37, 0
    %v60 = vsel %vm49, %v38, 0
    %v63 = vsel %vm49, %v39, 0
    %v66 = vsel %vm49, %v40, 0
    %v69 = vsel %vm49, %v41, 0
    %v72 = vsel %vm49, %v42, 0
    %vm74 = vcmask 1043456
    %v76 = vsel %vm74, %v44, 0
    %78 = vmatpush.msra.mxu0 0.0
    %79 = vmatpush.msra.mxu0 0.0
    %80 = vmatpush.msra.mxu0 0.0
    %81 = vmatpush.msra.mxu0 0.0
    %82 = vmatpush.msra.mxu0 0.0
    %83 = vmatpush.msra.mxu0 0.0
    %84 = vmatpush.msra.mxu0 0.0
    %85 = vmatpush.msra.mxu0 0.0
    %86 = vmatpush.msra.mxu0 0.0
    %87 = vmatpush.msra.mxu0 0.0
    %88 = vmatpush.msra.mxu0 0.0
    %89 = vmatpush.msra.mxu0 0.0
    %90 = vmatpush.msra.mxu0 0.0
    %91 = vmatpush.msra.mxu0 0.0
    %92 = vmatpush.msra.mxu0 %v76
    %93 = vmatpush.msra.mxu0 %v43
    %94 = vmatmul.f32.gmra.mxu0 %v51
    %v95 = vpop.f32.mrf.mxu0
    %v96 = vadd.f32 %v47, %v95
    %97 = vmatmul.f32.gmra.mxu0 %v54
    %v98 = vpop.f32.mrf.mxu0
    %v99 = vadd.f32 %v47, %v98
    %100 = vmatmul.f32.gmra.mxu0 %v57
    %v101 = vpop.f32.mrf.mxu0
    %v102 = vadd.f32 %v47, %v101
    %103 = vmatmul.f32.gmra.mxu0 %v60
    %v104 = vpop.f32.mrf.mxu0
    %v105 = vadd.f32 %v47, %v104
    %106 = vmatmul.f32.gmra.mxu0 %v63
    %v107 = vpop.f32.mrf.mxu0
    %v108 = vadd.f32 %v47, %v107
    %109 = vmatmul.f32.gmra.mxu0 %v66
    %v110 = vpop.f32.mrf.mxu0
    %v111 = vadd.f32 %v47, %v110
    %112 = vmatmul.f32.gmra.mxu0 %v69
    %v113 = vpop.f32.mrf.mxu0
    %v114 = vadd.f32 %v47, %v113
    %115 = vmatmul.f32.gmra.mxu0 %v72
    %v116 = vpop.f32.mrf.mxu0
    %v117 = vadd.f32 %v47, %v116
    %118 = vdwg.mxu0
    %vm119 = vcmask 261120
    %v120 = vsel %vm119, %v96, 0.0
    %v121 = vsel %vm119, %v99, 0.0
    %v122 = vadd.f32 %v120, %v121
    %v123 = vsel %vm119, %v102, 0.0
    %v124 = vadd.f32 %v122, %v123
    %v125 = vsel %vm119, %v105, 0.0
    %v126 = vadd.f32 %v124, %v125
    %v127 = vsel %vm119, %v108, 0.0
    %v128 = vadd.f32 %v126, %v127
    %v129 = vsel %vm119, %v111, 0.0
    %v130 = vadd.f32 %v128, %v129
    %v131 = vsel %vm119, %v114, 0.0
    %v132 = vadd.f32 %v130, %v131
    %v133 = vsel %vm119, %v117, 0.0
    %v134 = vadd.f32 %v132, %v133
    %v135 = vrot.slane %v134, 4
    %v136 = vadd.f32 %v134, %v135
    %v137 = vrot.slane %v136, 2
    %v138 = vadd.f32 %v136, %v137
    %v139 = vrot.slane %v138, 1
    %v140 = vadd.f32 %v138, %v139
    %v141 = vmul.f32 %v140, 0.015625
    %v142 = vmul.f32 %v96, %v96
    %v143 = vmul.f32 %v99, %v99
    %v144 = vmul.f32 %v102, %v102
    %v145 = vmul.f32 %v105, %v105
    %v146 = vmul.f32 %v108, %v108
    %v147 = vmul.f32 %v111, %v111
    %v148 = vmul.f32 %v114, %v114
    %v149 = vmul.f32 %v117, %v117
    %v150 = vsel %vm119, %v142, 0.0
    %v151 = vsel %vm119, %v143, 0.0
    %v152 = vadd.f32 %v150, %v151
    %v153 = vsel %vm119, %v144, 0.0
    %v154 = vadd.f32 %v152, %v153
    %v155 = vsel %vm119, %v145, 0.0
    %v156 = vadd.f32 %v154, %v155
    %v157 = vsel %vm119, %v146, 0.0
    %v158 = vadd.f32 %v156, %v157
    %v159 = vsel %vm119, %v147, 0.0
    %v160 = vadd.f32 %v158, %v159
    %v161 = vsel %vm119, %v148, 0.0
    %v162 = vadd.f32 %v160, %v161
    %v163 = vsel %vm119, %v149, 0.0
    %v164 = vadd.f32 %v162, %v163
    %v165 = vrot.slane %v164, 4
    %v166 = vadd.f32 %v164, %v165
    %v167 = vrot.slane %v166, 2
    %v168 = vadd.f32 %v166, %v167
    %v169 = vrot.slane %v168, 1
    %v170 = vadd.f32 %v168, %v169
    %v171 = vmul.f32 %v170, 0.015625
    %v172 = vmul.f32 %v141, %v141
    %v173 = vsub.f32 %v171, %v172
    %v174 = vmax.f32 %v173, 0.0
    %v175 = vlaneseq
    %v176 = vand.u32 %v175, 127
    %v177 = vld [vmem:[%s3] sm:$0x1]
    %v178 = vadd.f32 %v174, 1e-05
    %v179 = vrsqrt.pop %v178
    %v180 = vmul.f32 %v179, %v178
    %v181 = vmul.f32 %v180, %v179
    %v182 = vmul.f32 0.5, %v181
    %v183 = vsub.f32 1.5, %v182
    %v184 = vmul.f32 %v179, %v183
    %vm185 = vweird.f32 %v178
    %vm186 = vweird.f32 %v179
    %vm187 = vmor %vm185, %vm186
    %v188 = vsel %vm187, %v179, %v184
    %v189 = vmul.f32 %v177, %v188
    %v190 = vld [vmem:[%s4] sm:$0x1]
    %v191 = vmul.f32 %v141, %v189
    %v192 = vsub.f32 %v190, %v191
    %vm193 = vcmp.ge.s32.totalorder %v176, 8
    %v194 = vsel %vm193, %v189, 1.0
    %v195 = vsel %vm193, %v192, 0.0
    %v196 = vperm.slane %v194, 0
    %v197 = vmul.f32 %v96, %v196
    %v198 = vmul.f32 %v99, %v196
    %v199 = vmul.f32 %v102, %v196
    %v200 = vmul.f32 %v105, %v196
    %v201 = vmul.f32 %v108, %v196
    %v202 = vmul.f32 %v111, %v196
    %v203 = vmul.f32 %v114, %v196
    %v204 = vmul.f32 %v117, %v196
    %v205 = vperm.slane %v195, 0
    %v206 = vadd.f32 %v197, %v205
    %v207 = vadd.f32 %v198, %v205
    %v208 = vadd.f32 %v199, %v205
    %v209 = vadd.f32 %v200, %v205
    %v210 = vadd.f32 %v201, %v205
    %v211 = vadd.f32 %v202, %v205
    %v212 = vadd.f32 %v203, %v205
    %v213 = vadd.f32 %v204, %v205
    %v214 = vmax.f32 %v206, 0.0
    %v215 = vmax.f32 %v207, 0.0
    %v216 = vmax.f32 %v208, 0.0
    %v217 = vmax.f32 %v209, 0.0
    %v218 = vmax.f32 %v210, 0.0
    %v219 = vmax.f32 %v211, 0.0
    %v220 = vmax.f32 %v212, 0.0
    %v221 = vmax.f32 %v213, 0.0
    %v222 = vld [vmem:[%s5] sm:$0xff]
    %v223 = vld [vmem:[%s5 + $0x8] sm:$0xff]
    %v224 = vld [vmem:[%s5 + $0x10] sm:$0xff]
    %v225 = vld [vmem:[%s5 + $0x18] sm:$0xff]
    %v226 = vld [vmem:[%s6] sm:$0x1]
    %v228 = vperm.slane %v226, 0
    %v231 = vsel %vm119, %v214, 0
    %v234 = vsel %vm119, %v215, 0
    %v237 = vsel %vm119, %v216, 0
    %v240 = vsel %vm119, %v217, 0
    %v243 = vsel %vm119, %v218, 0
    %v246 = vsel %vm119, %v219, 0
    %v249 = vsel %vm119, %v220, 0
    %v252 = vsel %vm119, %v221, 0
    %254 = vmatpush.msra.mxu0 0.0
    %255 = vmatpush.msra.mxu0 0.0
    %256 = vmatpush.msra.mxu0 0.0
    %257 = vmatpush.msra.mxu0 0.0
    %258 = vmatpush.msra.mxu0 0.0
    %259 = vmatpush.msra.mxu0 0.0
    %260 = vmatpush.msra.mxu0 0.0
    %261 = vmatpush.msra.mxu0 0.0
    %262 = vmatpush.msra.mxu0 0.0
    %263 = vmatpush.msra.mxu0 0.0
    %264 = vmatpush.msra.mxu0 0.0
    %265 = vmatpush.msra.mxu0 0.0
    %266 = vmatpush.msra.mxu0 %v225
    %267 = vmatpush.msra.mxu0 %v224
    %268 = vmatpush.msra.mxu0 %v223
    %269 = vmatpush.msra.mxu0 %v222
    %270 = vmatmul.f32.gmra.mxu0 %v231
    %v271 = vpop.f32.mrf.mxu0
    %v272 = vadd.f32 %v228, %v271
    %273 = vmatmul.f32.gmra.mxu0 %v234
    %v274 = vpop.f32.mrf.mxu0
    %v275 = vadd.f32 %v228, %v274
    %276 = vmatmul.f32.gmra.mxu0 %v237
    %v277 = vpop.f32.mrf.mxu0
    %v278 = vadd.f32 %v228, %v277
    %279 = vmatmul.f32.gmra.mxu0 %v240
    %v280 = vpop.f32.mrf.mxu0
    %v281 = vadd.f32 %v228, %v280
    %282 = vmatmul.f32.gmra.mxu0 %v243
    %v283 = vpop.f32.mrf.mxu0
    %v284 = vadd.f32 %v228, %v283
    %285 = vmatmul.f32.gmra.mxu0 %v246
    %v286 = vpop.f32.mrf.mxu0
    %v287 = vadd.f32 %v228, %v286
    %288 = vmatmul.f32.gmra.mxu0 %v249
    %v289 = vpop.f32.mrf.mxu0
    %v290 = vadd.f32 %v228, %v289
    %291 = vmatmul.f32.gmra.mxu0 %v252
    %v292 = vpop.f32.mrf.mxu0
    %v293 = vadd.f32 %v228, %v292
    %294 = vdwg.mxu0
    %vm295 = vcmask 72704
    %296 = vst.msk [vmem:[%s9] sm:$0xff] %vm295, %v272
    %297 = vst.msk [vmem:[%s9 + $0x8] sm:$0xff] %vm295, %v275
    %298 = vst.msk [vmem:[%s9 + $0x10] sm:$0xff] %vm295, %v278
    %299 = vst.msk [vmem:[%s9 + $0x18] sm:$0xff] %vm295, %v281
    %300 = vst.msk [vmem:[%s9 + $0x20] sm:$0xff] %vm295, %v284
    %301 = vst.msk [vmem:[%s9 + $0x28] sm:$0xff] %vm295, %v287
    %302 = vst.msk [vmem:[%s9 + $0x30] sm:$0xff] %vm295, %v290
    %303 = vst.msk [vmem:[%s9 + $0x38] sm:$0xff] %vm295, %v293
    %v304 = vld [vmem:[%s7] sm:$0xff]
    %v305 = vld [vmem:[%s7 + $0x8] sm:$0xff]
    %v306 = vld [vmem:[%s7 + $0x10] sm:$0xff]
    %v307 = vld [vmem:[%s7 + $0x18] sm:$0xff]
    %v308 = vld [vmem:[%s7 + $0x20] sm:$0xff]
    %v309 = vld [vmem:[%s7 + $0x28] sm:$0xff]
    %v310 = vld [vmem:[%s7 + $0x30] sm:$0xff]
    %v311 = vld [vmem:[%s7 + $0x38] sm:$0xff]
    %v312 = vld [vmem:[%s8] sm:$0x3]
    %v314 = vperm.slane %v312, 0
    %v315 = vperm.slane %v312, 1
    %318 = vmatpush.msra.mxu0 0.0
    %319 = vmatpush.msra.mxu0 0.0
    %320 = vmatpush.msra.mxu0 0.0
    %321 = vmatpush.msra.mxu0 0.0
    %322 = vmatpush.msra.mxu0 0.0
    %323 = vmatpush.msra.mxu0 0.0
    %324 = vmatpush.msra.mxu0 0.0
    %325 = vmatpush.msra.mxu0 0.0
    %326 = vmatpush.msra.mxu0 0.0
    %327 = vmatpush.msra.mxu0 0.0
    %328 = vmatpush.msra.mxu0 0.0
    %329 = vmatpush.msra.mxu0 0.0
    %330 = vmatpush.msra.mxu0 %v310
    %331 = vmatpush.msra.mxu0 %v308
    %332 = vmatpush.msra.mxu0 %v306
    %333 = vmatpush.msra.mxu0 %v304
    %334 = vmatmul.f32.gmra.mxu0 %v231
    %v335 = vpop.f32.mrf.mxu0
    %v336 = vadd.f32 %v314, %v335
    %337 = vmatmul.f32.gmra.mxu0 %v234
    %v338 = vpop.f32.mrf.mxu0
    %v339 = vadd.f32 %v314, %v338
    %340 = vmatmul.f32.gmra.mxu0 %v237
    %v341 = vpop.f32.mrf.mxu0
    %v342 = vadd.f32 %v314, %v341
    %343 = vmatmul.f32.gmra.mxu0 %v240
    %v344 = vpop.f32.mrf.mxu0
    %v345 = vadd.f32 %v314, %v344
    %346 = vmatmul.f32.gmra.mxu0 %v243
    %v347 = vpop.f32.mrf.mxu0
    %v348 = vadd.f32 %v314, %v347
    %349 = vmatmul.f32.gmra.mxu0 %v246
    %v350 = vpop.f32.mrf.mxu0
    %v351 = vadd.f32 %v314, %v350
    %352 = vmatmul.f32.gmra.mxu0 %v249
    %v353 = vpop.f32.mrf.mxu0
    %v354 = vadd.f32 %v314, %v353
    %355 = vmatmul.f32.gmra.mxu0 %v252
    %v356 = vpop.f32.mrf.mxu0
    %v357 = vadd.f32 %v314, %v356
    %358 = vdwg.mxu0
    %359 = vmatpush.msra.mxu0 0.0
    %360 = vmatpush.msra.mxu0 0.0
    %361 = vmatpush.msra.mxu0 0.0
    %362 = vmatpush.msra.mxu0 0.0
    %363 = vmatpush.msra.mxu0 0.0
    %364 = vmatpush.msra.mxu0 0.0
    %365 = vmatpush.msra.mxu0 0.0
    %366 = vmatpush.msra.mxu0 0.0
    %367 = vmatpush.msra.mxu0 0.0
    %368 = vmatpush.msra.mxu0 0.0
    %369 = vmatpush.msra.mxu0 0.0
    %370 = vmatpush.msra.mxu0 0.0
    %371 = vmatpush.msra.mxu0 %v311
    %372 = vmatpush.msra.mxu0 %v309
    %373 = vmatpush.msra.mxu0 %v307
    %374 = vmatpush.msra.mxu0 %v305
    %375 = vmatmul.f32.gmra.mxu0 %v231
    %v376 = vpop.f32.mrf.mxu0
    %v377 = vadd.f32 %v315, %v376
    %378 = vmatmul.f32.gmra.mxu0 %v234
    %v379 = vpop.f32.mrf.mxu0
    %v380 = vadd.f32 %v315, %v379
    %381 = vmatmul.f32.gmra.mxu0 %v237
    %v382 = vpop.f32.mrf.mxu0
    %v383 = vadd.f32 %v315, %v382
    %384 = vmatmul.f32.gmra.mxu0 %v240
    %v385 = vpop.f32.mrf.mxu0
    %v386 = vadd.f32 %v315, %v385
    %387 = vmatmul.f32.gmra.mxu0 %v243
    %v388 = vpop.f32.mrf.mxu0
    %v389 = vadd.f32 %v315, %v388
    %390 = vmatmul.f32.gmra.mxu0 %v246
    %v391 = vpop.f32.mrf.mxu0
    %v392 = vadd.f32 %v315, %v391
    %393 = vmatmul.f32.gmra.mxu0 %v249
    %v394 = vpop.f32.mrf.mxu0
    %v395 = vadd.f32 %v315, %v394
    %396 = vmatmul.f32.gmra.mxu0 %v252
    %v397 = vpop.f32.mrf.mxu0
    %v398 = vadd.f32 %v315, %v397
    %399 = vdwg.mxu0
    %400 = vst [vmem:[#allocation2] sm:$0xff] %v336
    %vm401 = vcmask 326656
    %402 = vst.msk [vmem:[#allocation2 + $0x8] sm:$0xff] %vm401, %v377
    %403 = vst [vmem:[#allocation2 + $0x10] sm:$0xff] %v339
    %404 = vst.msk [vmem:[#allocation2 + $0x18] sm:$0xff] %vm401, %v380
    %405 = vst [vmem:[#allocation2 + $0x20] sm:$0xff] %v342
    %406 = vst.msk [vmem:[#allocation2 + $0x28] sm:$0xff] %vm401, %v383
    %407 = vst [vmem:[#allocation2 + $0x30] sm:$0xff] %v345
    %408 = vst.msk [vmem:[#allocation2 + $0x38] sm:$0xff] %vm401, %v386
    %409 = vst [vmem:[#allocation2 + $0x40] sm:$0xff] %v348
    %410 = vst.msk [vmem:[#allocation2 + $0x48] sm:$0xff] %vm401, %v389
    %411 = vst [vmem:[#allocation2 + $0x50] sm:$0xff] %v351
    %412 = vst.msk [vmem:[#allocation2 + $0x58] sm:$0xff] %vm401, %v392
    %413 = vst [vmem:[#allocation2 + $0x60] sm:$0xff] %v354
    %414 = vst.msk [vmem:[#allocation2 + $0x68] sm:$0xff] %vm401, %v395
    %415 = vst [vmem:[#allocation2 + $0x70] sm:$0xff] %v357
    %416 = vst.msk [vmem:[#allocation2 + $0x78] sm:$0xff] %vm401, %v398
    // Predicated region
    $region38: #{decoder_mlp.1} parent=1 // pred_check
      _
    $region39: #{decoder_mlp.1} parent=1 // pred_check_branch
      %418 = sbr.rel (0) target = $region41
    $region40: #{decoder_mlp.1} parent=1 // pred_region
      _
    $region41: #{decoder_mlp.1} parent=1 // pred_fallthru
      _
    // Predicated region
    $region42: #{decoder_mlp.1} parent=1 // pred_check
      _
    $region43: #{decoder_mlp.1} parent=1 // pred_check_branch
      %420 = sbr.rel (0) target = $region45
    $region44: #{decoder_mlp.1} parent=1 // pred_region
      %422 = vsyncadd [#allocation3], 0
      %s423 = sshll.u32 [#allocation2], 4
      %s424 = int_to_ptr.vmem [resolvable:$true] %s423
      %s425 = sshll.u32 %s10, 4
      %s426 = int_to_ptr.hbm [resolvable:$true] %s425
      %431 = dma.vmem_to_hbm [thread:$0]  %s424, 2048, %s426, [#allocation3], 256, 256, 16
    $region45: #{decoder_mlp.1} parent=1 // pred_fallthru
      _
    // Predicated region
    $region46: #{decoder_mlp.1} parent=1 // pred_check
      _
    $region47: #{decoder_mlp.1} parent=1 // pred_check_branch
      %433 = sbr.rel (0) target = $region49
    $region48: #{decoder_mlp.1} parent=1 // pred_region
      _
    $region49: #{decoder_mlp.1} parent=1 // pred_fallthru
      _
    // Predicated region
    $region50: #{decoder_mlp.1} parent=1 // pred_check
      _
    $region51: #{decoder_mlp.1} parent=1 // pred_check_branch
      %435 = sbr.rel (0) target = $region53
    $region52: #{decoder_mlp.1} parent=1 // pred_region
      %437 = dma.done [#allocation3], 2048
    $region53: #{decoder_mlp.1} parent=1 // pred_fallthru
      _
    %438 = vsyncpa [#allocation3], 1

</llo_original>
